<compile_context>
chip_gen: v5e
topology: v5e:2x2
jax: 0.10.0
libtpu: 0.0.40
codegen_flags: <defaults>
</compile_context>

<pallas_src>
import functools

import jax
import jax.numpy as jnp
from jax import lax
from jax.experimental import pallas as pl
from jax.experimental.pallas import tpu as pltpu


# ----------------------------------------------------------------------------
# Hardware / tiling helpers
# ----------------------------------------------------------------------------
def _round_up(x, m):
    return (x + m - 1) // m * m


@functools.lru_cache(maxsize=1)
def _hw_config():
    """Returns (vmem_limit_bytes, tile_budget_bytes, multi_core)."""
    kind = ""
    try:
        kind = jax.devices()[0].device_kind.lower()
    except Exception:
        pass
    multi_core = any(t in kind for t in ("v4", "v5p", "7"))  # 2 TensorCores / chip

    cap = None
    try:
        cap = int(pltpu.get_tpu_info().vmem_capacity_bytes)
    except Exception:
        cap = None
    if cap is None or cap <= 0:
        # Conservative defaults: 64 MiB per-core (v7x) / 128 MiB (v5e/v6e).
        cap = 64 * 1024 * 1024 if "7" in kind else 128 * 1024 * 1024
    if "7" in kind:
        cap = min(cap, 64 * 1024 * 1024)      # v7x VMEM is 64 MiB per TensorCore

    vmem_limit = (cap * 3) // 4               # ~48 MiB v7x, ~96 MiB v5e/v6e
    tile_budget = max(vmem_limit - 16 * 1024 * 1024, 24 * 1024 * 1024)
    return vmem_limit, tile_budget, multi_core


def _compiler_params(dims):
    vmem_limit, _, _ = _hw_config()
    return pltpu.CompilerParams(
        dimension_semantics=dims, vmem_limit_bytes=vmem_limit)


_TK_CANDIDATES = (2048, 1024, 512, 256, 128)


def _choose_tiles(M, K, itemsize, *, fused):
    """Pick (Mp, Kp, tm, tk) for the 'full Gram-column' layout.

    Returns None when even the smallest tiles overflow the VMEM budget
    (very large N*C); the caller then falls back to the fully tiled kernel.
    """
    _, budget, multi_core = _hw_config()
    Mp = _round_up(max(M, 1), 128)            # lane-dense Gram output
    Kp128 = _round_up(max(K, 1), 128)

    if multi_core and Mp >= 256:
        # Dual-TensorCore chips: make sure ni >= 2 so the "parallel" row axis
        # actually spans both cores.
        tm_pref = [t for t in (256, 128) if Mp % t == 0 and Mp // t >= 2] or [128]
    else:
        # Single TensorCore: prefer ni == 1 so F is streamed from HBM once,
        # then shrink the row block if VMEM forces it.
        tm_pref = [t for t in (Mp, 512, 256, 128) if t <= Mp and Mp % t == 0]
    seen = set()
    tm_pref = [t for t in tm_pref if not (t in seen or seen.add(t))]

    for tm in tm_pref:
        for tk in _TK_CANDIDATES:
            if tk > Kp128:
                continue
            need = 2 * Mp * tk * itemsize     # feature column block (double-buffered)
            need += 2 * tm * Mp * 4           # Gram output / target row block (dbl-buffered)
            if fused:
                need += tm * Mp * 4           # f32 accumulator scratch (fused kernel)
            if need <= budget:
                return Mp, _round_up(K, tk), tm, tk
    return None


def _prep_features(x, feature_dtype=None):
    """Reshape NCHW -> (M, K) keeping (or casting to) the MXU feed dtype."""
    a, b, c, d = x.shape
    M, K = a * b, c * d
    if feature_dtype is None:
        feature_dtype = x.dtype if x.dtype in (jnp.bfloat16, jnp.float32) else jnp.float32
    f = x.reshape(M, K).astype(feature_dtype)
    return f, M, K


def _pad_features(f, M, K, Mp, Kp):
    if (Mp, Kp) != (M, K):
        # Zero rows/cols do not change F @ F^T.
        f = jnp.pad(f, ((0, Mp - M), (0, Kp - K)))
    return f


# ----------------------------------------------------------------------------
# Kernel 1: Gram matrix  G = (F @ F^T) * inv_divisor      (view-trick layout)
# grid = (row blocks of G, K tiles).  The (tm, Mp) output block is resident
# across the K axis and accumulated in place.  The (tm, tk) row operand is a
# zero-cost VMEM view sliced out of the resident (Mp, tk) feature block, so
# features are streamed from HBM only once per row block.
# ----------------------------------------------------------------------------
def _gram_rows_kernel(f_ref, g_ref, *, inv_divisor, tm):
    i = pl.program_id(0)
    k = pl.program_id(1)

    @pl.when(k == 0)
    def _():
        g_ref[...] = jnp.zeros_like(g_ref)

    fc = f_ref[...]                                   # (Mp, tk) Gram-column operand
    row0 = pl.multiple_of(i * tm, tm)
    fr = f_ref[pl.ds(row0, tm), :]                    # (tm, tk) Gram-row operand (view)
    # Contract the last dim of both operands: transpose-free, MXU-native form.
    g_ref[...] += lax.dot_general(
        fr, fc,
        dimension_numbers=(((1,), (1,)), ((), ())),
        preferred_element_type=jnp.float32)

    @pl.when(k == pl.num_programs(1) - 1)
    def _():
        g_ref[...] = g_ref[...] * inv_divisor         # multiply, not divide


# ----------------------------------------------------------------------------
# Kernel 1b (fallback): fully (row, col, K)-tiled Gram for very large N*C,
# where a whole (Mp, tk) column block no longer fits VMEM.
# ----------------------------------------------------------------------------
def _gram_tiled_kernel(fr_ref, fc_ref, g_ref, *, inv_divisor):
    k = pl.program_id(2)

    @pl.when(k == 0)
    def _():
        g_ref[...] = jnp.zeros_like(g_ref)

    g_ref[...] += lax.dot_general(
        fr_ref[...], fc_ref[...],
        dimension_numbers=(((1,), (1,)), ((), ())),
        preferred_element_type=jnp.float32)

    @pl.when(k == pl.num_programs(2) - 1)
    def _():
        g_ref[...] = g_ref[...] * inv_divisor


def _gram_padded(f, M, K, inv_divisor, *, force_tiled=False):
    """(Mp, Mp) f32 padded Gram of the (M, K) feature matrix `f`."""
    itemsize = jnp.dtype(f.dtype).itemsize
    Mp = _round_up(max(M, 1), 128)
    tiles = None if force_tiled else _choose_tiles(M, K, itemsize, fused=False)

    if tiles is not None:
        Mp, Kp, tm, tk = tiles
        fp = _pad_features(f, M, K, Mp, Kp)
        ni, nk = Mp // tm, Kp // tk
        kern = functools.partial(_gram_rows_kernel, inv_divisor=inv_divisor, tm=tm)
        return pl.pallas_call(
            kern,
            out_shape=jax.ShapeDtypeStruct((Mp, Mp), jnp.float32),
            grid_spec=pltpu.PrefetchScalarGridSpec(
                num_scalar_prefetch=0,
                grid=(ni, nk),
                in_specs=[pl.BlockSpec((Mp, tk), lambda i, k: (0, k))],
                out_specs=pl.BlockSpec((tm, Mp), lambda i, k: (i, 0)),
            ),
            compiler_params=_compiler_params(("parallel", "arbitrary")),
        )(fp)

    # ---- fallback: tile the Gram's column (lane) axis as well -------------
    _, budget, _ = _hw_config()
    tm = tn = 256 if Mp % 256 == 0 else 128
    Kp128 = _round_up(max(K, 1), 128)
    tk = 128
    for cand in _TK_CANDIDATES:
        if cand > Kp128:
            continue
        need = 2 * (tm + tn) * cand * itemsize + 2 * tm * tn * 4
        if need <= budget:
            tk = cand
            break
    Kp = _round_up(K, tk)
    fp = _pad_features(f, M, K, Mp, Kp)
    ni, nj, nk = Mp // tm, Mp // tn, Kp // tk
    kern = functools.partial(_gram_tiled_kernel, inv_divisor=inv_divisor)
    return pl.pallas_call(
        kern,
        out_shape=jax.ShapeDtypeStruct((Mp, Mp), jnp.float32),
        grid_spec=pltpu.PrefetchScalarGridSpec(
            num_scalar_prefetch=0,
            grid=(ni, nj, nk),
            in_specs=[pl.BlockSpec((tm, tk), lambda i, j, k: (i, k)),
                      pl.BlockSpec((tn, tk), lambda i, j, k: (j, k))],
            out_specs=pl.BlockSpec((tm, tn), lambda i, j, k: (i, j)),
        ),
        compiler_params=_compiler_params(("parallel", "parallel", "arbitrary")),
    )(fp, fp)


def gram_matrix(x, *, feature_dtype=None):
    """Gram matrix of an NCHW feature map, matching StyleLoss.gram_matrix."""
    a, b, c, d = x.shape
    f, M, K = _prep_features(x, feature_dtype)
    G = _gram_padded(f, M, K, 1.0 / float(a * b * c * d))
    return G[:M, :M]


# ----------------------------------------------------------------------------
# Kernel 2 (fused forward): Gram of the input + MSE against the target Gram.
# Same (row block, K tile) grid; a (tm, Mp) VMEM scratch holds the running
# Gram row block.  On the last K step we normalize (reciprocal multiply),
# subtract the matching target row block and emit one squared-error partial
# per row block (aligned (1, 8, 128) tile -> unmasked stores, row axis stays
# "parallel").  The trivial final sum / (M*M) happens outside.
# ----------------------------------------------------------------------------
def _style_loss_kernel(f_ref, t_ref, part_ref, acc_ref, *, inv_divisor, tm):
    i = pl.program_id(0)
    k = pl.program_id(1)

    @pl.when(k == 0)
    def _():
        acc_ref[...] = jnp.zeros_like(acc_ref)

    fc = f_ref[...]                                   # (Mp, tk)
    row0 = pl.multiple_of(i * tm, tm)
    fr = f_ref[pl.ds(row0, tm), :]                    # (tm, tk)
    acc_ref[...] += lax.dot_general(
        fr, fc,
        dimension_numbers=(((1,), (1,)), ((), ())),
        preferred_element_type=jnp.float32)

    @pl.when(k == pl.num_programs(1) - 1)
    def _():
        diff = acc_ref[...] * inv_divisor - t_ref[...]
        part_ref[...] = jnp.broadcast_to(jnp.sum(diff * diff), (1, 8, 128))


def init_style_loss(target_feature, *, feature_dtype=None):
    """StyleLoss.__init__: precompute the target Gram (kept padded to Mp)."""
    a, b, c, d = target_feature.shape
    f, M, K = _prep_features(target_feature, feature_dtype)
    Gp = _gram_padded(f, M, K, 1.0 / float(a * b * c * d))   # (Mp, Mp), pad region is 0
    return {"target_padded": Gp, "shape": (a, b, c, d), "M": M}


def style_loss_forward(x, state, *, feature_dtype=None):
    """StyleLoss.forward: returns (input, loss) with loss = mse(gram(x), target)."""
    a, b, c, d = x.shape
    assert (a, b, c, d) == tuple(state["shape"]), "input must match target_feature shape"
    f, M, K = _prep_features(x, feature_dtype)
    inv_div = 1.0 / float(a * b * c * d)
    itemsize = jnp.dtype(f.dtype).itemsize
    tgt = state["target_padded"]                      # (Mp, Mp) f32, zero-padded

    tiles = _choose_tiles(M, K, itemsize, fused=True)
    if tiles is None:
        # Huge N*C fallback: tiled Gram kernel + XLA squared-error reduction
        # (padded entries are zero in both operands, so they contribute 0).
        Gp = _gram_padded(f, M, K, inv_div, force_tiled=True)
        loss = jnp.sum((Gp - tgt) ** 2) / jnp.float32(M * M)
        return x, loss

    Mp, Kp, tm, tk = tiles
    assert tgt.shape == (Mp, Mp), "target Gram padding mismatch"
    fp = _pad_features(f, M, K, Mp, Kp)
    ni, nk = Mp // tm, Kp // tk
    kern = functools.partial(_style_loss_kernel, inv_divisor=inv_div, tm=tm)

    parts = pl.pallas_call(
        kern,
        out_shape=jax.ShapeDtypeStruct((ni, 8, 128), jnp.float32),
        grid_spec=pltpu.PrefetchScalarGridSpec(
            num_scalar_prefetch=0,
            grid=(ni, nk),
            in_specs=[
                pl.BlockSpec((Mp, tk), lambda i, k: (0, k)),   # features (Gram-column block)
                pl.BlockSpec((tm, Mp), lambda i, k: (i, 0)),   # target Gram row block
            ],
            out_specs=pl.BlockSpec((1, 8, 128), lambda i, k: (i, 0, 0)),
            scratch_shapes=[pltpu.VMEM((tm, Mp), jnp.float32)],
        ),
        compiler_params=_compiler_params(("parallel", "arbitrary")),
    )(fp, tgt)

    loss = jnp.sum(parts[:, 0, 0]) / jnp.float32(M * M)
    return x, loss


# ----------------------------------------------------------------------------
# Pure-JAX references for correctness checking
# ----------------------------------------------------------------------------
def _gram_ref(x):
    a, b, c, d = x.shape
    f = x.reshape(a * b, c * d).astype(jnp.float32)
    return (f @ f.T) / (a * b * c * d)


def _loss_ref(x, target_feature):
    G = _gram_ref(x)
    T = _gram_ref(target_feature)
    return jnp.mean((G - T) ** 2)


if __name__ == "__main__":
    key = jax.random.PRNGKey(0)
    k1, k2 = jax.random.split(key)

    # Small NCHW shapes: batch=2, channels=4, spatial=16x16
    x = jax.random.normal(k1, (2, 4, 16, 16), dtype=jnp.float32)
    target_feature = jax.random.normal(k2, (2, 4, 16, 16), dtype=jnp.float32)

    # "__init__": compute (and keep padded) target Gram matrix
    state = init_style_loss(target_feature)
    target_G = gram_matrix(target_feature)

    # "forward": returns input unchanged; loss is MSE between Gram matrices
    out, loss = style_loss_forward(x, state)
    jax.block_until_ready((out, loss))

    # Verify against pure-JAX references
    ref_G = _gram_ref(target_feature)
    ref_loss = _loss_ref(x, target_feature)
    M = target_feature.shape[0] * target_feature.shape[1]
    assert jnp.allclose(target_G, ref_G, rtol=1e-5, atol=1e-6), "gram mismatch"
    assert jnp.allclose(state["target_padded"][:M, :M], ref_G, rtol=1e-5, atol=1e-6), \
        "padded target gram mismatch"
    assert jnp.allclose(out, x), "forward must pass the input through unchanged"
    assert jnp.allclose(loss, ref_loss, rtol=1e-5, atol=1e-6), (loss, ref_loss)

    # Exercise the column-tiled fallback path (used automatically for huge N*C).
    f_small = x.reshape(8, 256).astype(jnp.float32)
    G_tiled = _gram_padded(f_small, 8, 256, 1.0 / float(x.size), force_tiled=True)[:8, :8]
    assert jnp.allclose(G_tiled, _gram_ref(x), rtol=1e-5, atol=1e-6), "tiled gram mismatch"

    # Optional bf16 feature feed (MXU-native rate, f32 accumulation).
    out16, loss16 = style_loss_forward(x, state, feature_dtype=jnp.bfloat16)
    jax.block_until_ready(loss16)
    assert jnp.allclose(out16, x)
    assert jnp.allclose(loss16, ref_loss, rtol=5e-2, atol=1e-6), (loss16, ref_loss)

    print("KERNEL_OK")
</pallas_src>

<mosaic_0001>
module attributes {stable_mosaic.version = 11 : i64} {
  func.func @_gram_rows_kernel(%arg0: i32, %arg1: i32, %arg2: memref<128x256xf32, #tpu.memory_space<vmem>>, %arg3: memref<128x128xf32, #tpu.memory_space<vmem>>) attributes {dimension_semantics = [#tpu.dimension_semantics<parallel>, #tpu.dimension_semantics<arbitrary>], iteration_bounds = array<i64: 1, 1>, scalar_prefetch = 0 : i64, scratch_operands = 0 : i64, tpu.core_type = #tpu.core_type<tc>, window_params = [{transform_indices = @transform_0, window_bounds = array<i64: 128, 256>}, {transform_indices = @transform_1, window_bounds = array<i64: 128, 128>}]} {
    %c0_i32 = arith.constant 0 : i32
    %0 = arith.cmpi eq, %arg1, %c0_i32 : i32
    %1 = arith.extui %0 : i1 to i32
    %c0_i32_0 = arith.constant 0 : i32
    %2 = arith.cmpi ne, %1, %c0_i32_0 : i32
    scf.if %2 {
      %cst_9 = arith.constant 0.000000e+00 : f32
      %15 = vector.broadcast %cst_9 : f32 to vector<128x128xf32>
      %c0_10 = arith.constant 0 : index
      %c0_11 = arith.constant 0 : index
      %16 = vector.load %arg3[%c0_10, %c0_11] : memref<128x128xf32, #tpu.memory_space<vmem>>, vector<128x128xf32>
      tpu.vector_store %arg3[%c0_10, %c0_11], %15 {strides = array<i32>} : memref<128x128xf32, #tpu.memory_space<vmem>>, vector<128x128xf32>,
    } else {
    }
    %c0 = arith.constant 0 : index
    %c0_1 = arith.constant 0 : index
    %3 = vector.load %arg2[%c0, %c0_1] : memref<128x256xf32, #tpu.memory_space<vmem>>, vector<128x256xf32>
    %c128_i32 = arith.constant 128 : i32
    %4 = arith.muli %arg0, %c128_i32 : i32
    %5 = tpu.assume_multiple %4, 128 : i32
    %6 = arith.index_cast %5 : i32 to index
    %c0_2 = arith.constant 0 : index
    %7 = vector.load %arg2[%6, %c0_2] : memref<128x256xf32, #tpu.memory_space<vmem>>, vector<128x256xf32>
    %c0_3 = arith.constant 0 : index
    %c0_4 = arith.constant 0 : index
    %8 = vector.load %arg3[%c0_3, %c0_4] : memref<128x128xf32, #tpu.memory_space<vmem>>, vector<128x128xf32>
    %cst = arith.constant dense<0.000000e+00> : vector<128x128xf32>
    %9 = tpu.matmul %7, %3, %cst {dimension_numbers = #tpu.dot_dimension_numbers<[1], [1], [0], [0], [0, 0, 1, 0], [], []>} : vector<128x256xf32>, vector<128x256xf32>, vector<128x128xf32> -> vector<128x128xf32>
    %10 = arith.addf %8, %9 : vector<128x128xf32>
    %c0_5 = arith.constant 0 : index
    %c0_6 = arith.constant 0 : index
    %11 = vector.load %arg3[%c0_5, %c0_6] : memref<128x128xf32, #tpu.memory_space<vmem>>, vector<128x128xf32>
    tpu.vector_store %arg3[%c0_5, %c0_6], %10 {strides = array<i32>} : memref<128x128xf32, #tpu.memory_space<vmem>>, vector<128x128xf32>,
    %c0_i32_7 = arith.constant 0 : i32
    %12 = arith.cmpi eq, %arg1, %c0_i32_7 : i32
    %13 = arith.extui %12 : i1 to i32
    %c0_i32_8 = arith.constant 0 : i32
    %14 = arith.cmpi ne, %13, %c0_i32_8 : i32
    scf.if %14 {
      %c0_9 = arith.constant 0 : index
      %c0_10 = arith.constant 0 : index
      %15 = vector.load %arg3[%c0_9, %c0_10] : memref<128x128xf32, #tpu.memory_space<vmem>>, vector<128x128xf32>
      %cst_11 = arith.constant 4.8828125E-4 : f32
      %16 = vector.broadcast %cst_11 : f32 to vector<128x128xf32>
      %17 = arith.mulf %15, %16 : vector<128x128xf32>
      %c0_12 = arith.constant 0 : index
      %c0_13 = arith.constant 0 : index
      %18 = vector.load %arg3[%c0_12, %c0_13] : memref<128x128xf32, #tpu.memory_space<vmem>>, vector<128x128xf32>
      tpu.vector_store %arg3[%c0_12, %c0_13], %17 {strides = array<i32>} : memref<128x128xf32, #tpu.memory_space<vmem>>, vector<128x128xf32>,
    } else {
    }
    return
  }
  func.func @transform_0(%arg0: i32, %arg1: i32) -> (i32, i32) {
    %c0_i32 = arith.constant 0 : i32
    %c0_i32_0 = arith.constant 0 : i32
    return %c0_i32, %arg1 : i32, i32
  }
  func.func @transform_1(%arg0: i32, %arg1: i32) -> (i32, i32) {
    %c0_i32 = arith.constant 0 : i32
    %c0_i32_0 = arith.constant 0 : i32
    return %arg0, %c0_i32 : i32, i32
  }
}

</mosaic_0001>

<llo_original>
// kernel: tpu_custom_call.1
$region0: #{tpu_custom_call.1}
  #allocation0 [shape = 'u32[]', space=smem, size = 0x4, offset = 0x4, fixed_abs, tag = 'smem constant byte address 0x4 - core index']
  #allocation1 [shape = 'u32[72,128]{1,0:T(1,128)}', space=vmem, size = 0x9000, scoped, tag = 'internal scratch']
  %s0 = inlined_call_operand.hbm [shape: f32[128,256], index: 0, kind: input, shape index: {}]
  %s1 = inlined_call_operand.hbm [shape: f32[128,128], index: 1, kind: output, shape index: {}]
  %s2 = sld [smem:[#allocation0]]
  $region26: #{tpu_custom_call.1} parent=0
    _
  %s4 = ssub.s32 1, %s2
  %s5 = scalar_select 0, %s4, %s2
  $region1: #{tpu_custom_call.1} parent=0
    #allocation2 [shape = 'u8[131072]{0}', space=vmem, size = 0x20000, scoped, tag = 'input window, operand 0, single buffered']
    #allocation3 [shape = 's32[1]{0}', space=sflag, size = 0x4, scoped, tag = 'scoped memory for tpu_custom_call.1']
    #allocation4 [shape = 's32[1]{0}', space=sflag, size = 0x4, scoped, tag = 'scoped memory for tpu_custom_call.1']
    #allocation5 [shape = 'u8[65536]{0}', space=vmem, size = 0x10000, scoped, tag = 'output window, operand 0, single buffered']
    %6 = vsyncpa [#allocation3], 0
    %7 = vsyncpa [#allocation4], 0
    // Predicated region
    $region2: #{tpu_custom_call.1} parent=1 // pred_check
      _
    $region3: #{tpu_custom_call.1} parent=1 // pred_check_branch
      %9 = sbr.rel (0) target = $region5
    $region4: #{tpu_custom_call.1} parent=1 // pred_region
      %11 = vsyncadd [#allocation3], 0
      %s12 = sshll.u32 %s0, 4
      %s13 = int_to_ptr.hbm [resolvable:$true] %s12
      %s14 = sshll.u32 [#allocation2], 4
      %s15 = int_to_ptr.vmem [resolvable:$true] %s14
      %20 = dma.hbm_to_vmem [thread:$0]  %s13, 4096, %s15, [#allocation3], 256, 256, 16
    $region5: #{tpu_custom_call.1} parent=1 // pred_fallthru
      _
    // Predicated region
    $region6: #{tpu_custom_call.1} parent=1 // pred_check
      _
    $region7: #{tpu_custom_call.1} parent=1 // pred_check_branch
      %22 = sbr.rel (0) target = $region9
    $region8: #{tpu_custom_call.1} parent=1 // pred_region
      %24 = dma.done [#allocation3], 4096
    $region9: #{tpu_custom_call.1} parent=1 // pred_fallthru
      _
    %p25 = scmp.eq.s32.totalorder 0, 0
    // Predicated region
    $region10: #{tpu_custom_call.1} parent=1 // pred_check
      %p26 = pneg %p25
    $region11: #{tpu_custom_call.1} parent=1 // pred_check_branch
      %28 = sbr.rel (%p26) target = $region13
    $region12: #{tpu_custom_call.1} parent=1 // pred_region
      %29 = vst [vmem:[#allocation5] sm:$0xff] 0.0
      %30 = vst [vmem:[#allocation5 + $0x8] sm:$0xff] 0.0
      %31 = vst [vmem:[#allocation5 + $0x10] sm:$0xff] 0.0
      %32 = vst [vmem:[#allocation5 + $0x18] sm:$0xff] 0.0
      %33 = vst [vmem:[#allocation5 + $0x20] sm:$0xff] 0.0
      %34 = vst [vmem:[#allocation5 + $0x28] sm:$0xff] 0.0
      %35 = vst [vmem:[#allocation5 + $0x30] sm:$0xff] 0.0
      %36 = vst [vmem:[#allocation5 + $0x38] sm:$0xff] 0.0
      %37 = vst [vmem:[#allocation5 + $0x40] sm:$0xff] 0.0
      %38 = vst [vmem:[#allocation5 + $0x48] sm:$0xff] 0.0
      %39 = vst [vmem:[#allocation5 + $0x50] sm:$0xff] 0.0
      %40 = vst [vmem:[#allocation5 + $0x58] sm:$0xff] 0.0
      %41 = vst [vmem:[#allocation5 + $0x60] sm:$0xff] 0.0
      %42 = vst [vmem:[#allocation5 + $0x68] sm:$0xff] 0.0
      %43 = vst [vmem:[#allocation5 + $0x70] sm:$0xff] 0.0
      %44 = vst [vmem:[#allocation5 + $0x78] sm:$0xff] 0.0
    $region13: #{tpu_custom_call.1} parent=1 // pred_fallthru
      _
    %v45 = vld [vmem:[#allocation2] sm:$0xff]
    %v46 = vld [vmem:[#allocation2 + $0x8] sm:$0xff]
    %v47 = vld [vmem:[#allocation2 + $0x10] sm:$0xff]
    %v48 = vld [vmem:[#allocation2 + $0x18] sm:$0xff]
    %v49 = vld [vmem:[#allocation2 + $0x20] sm:$0xff]
    %v50 = vld [vmem:[#allocation2 + $0x28] sm:$0xff]
    %v51 = vld [vmem:[#allocation2 + $0x30] sm:$0xff]
    %v52 = vld [vmem:[#allocation2 + $0x38] sm:$0xff]
    %v53 = vld [vmem:[#allocation2 + $0x40] sm:$0xff]
    %v54 = vld [vmem:[#allocation2 + $0x48] sm:$0xff]
    %v55 = vld [vmem:[#allocation2 + $0x50] sm:$0xff]
    %v56 = vld [vmem:[#allocation2 + $0x58] sm:$0xff]
    %v57 = vld [vmem:[#allocation2 + $0x60] sm:$0xff]
    %v58 = vld [vmem:[#allocation2 + $0x68] sm:$0xff]
    %v59 = vld [vmem:[#allocation2 + $0x70] sm:$0xff]
    %v60 = vld [vmem:[#allocation2 + $0x78] sm:$0xff]
    %v61 = vld [vmem:[#allocation2 + $0x80] sm:$0xff]
    %v62 = vld [vmem:[#allocation2 + $0x88] sm:$0xff]
    %v63 = vld [vmem:[#allocation2 + $0x90] sm:$0xff]
    %v64 = vld [vmem:[#allocation2 + $0x98] sm:$0xff]
    %v65 = vld [vmem:[#allocation2 + $0xa0] sm:$0xff]
    %v66 = vld [vmem:[#allocation2 + $0xa8] sm:$0xff]
    %v67 = vld [vmem:[#allocation2 + $0xb0] sm:$0xff]
    %v68 = vld [vmem:[#allocation2 + $0xb8] sm:$0xff]
    %v69 = vld [vmem:[#allocation2 + $0xc0] sm:$0xff]
    %v70 = vld [vmem:[#allocation2 + $0xc8] sm:$0xff]
    %v71 = vld [vmem:[#allocation2 + $0xd0] sm:$0xff]
    %v72 = vld [vmem:[#allocation2 + $0xd8] sm:$0xff]
    %v73 = vld [vmem:[#allocation2 + $0xe0] sm:$0xff]
    %v74 = vld [vmem:[#allocation2 + $0xe8] sm:$0xff]
    %v75 = vld [vmem:[#allocation2 + $0xf0] sm:$0xff]
    %v76 = vld [vmem:[#allocation2 + $0xf8] sm:$0xff]
    %s77 = smul.u32 0, 128
    %s78 = sshra.s32 %s77, 3
    %s79 = sand.u32 %s77, 7
    %s80 = smul.u32 %s78, 2
    %s81 = smul.addr %s80, 8
    %s82 = scalar_lea.vmem [#allocation2], %s81
    %v83 = vld [vmem:[%s82] sm:$0xff]
    %v84 = vld [vmem:[%s82 + $0x8] sm:$0xff]
    %v85 = vld [vmem:[%s82 + $0x10] sm:$0xff]
    %v86 = vld [vmem:[%s82 + $0x18] sm:$0xff]
    %v87 = vld [vmem:[%s82 + $0x20] sm:$0xff]
    %v88 = vld [vmem:[%s82 + $0x28] sm:$0xff]
    %v89 = vld [vmem:[%s82 + $0x30] sm:$0xff]
    %v90 = vld [vmem:[%s82 + $0x38] sm:$0xff]
    %v91 = vld [vmem:[%s82 + $0x40] sm:$0xff]
    %v92 = vld [vmem:[%s82 + $0x48] sm:$0xff]
    %v93 = vld [vmem:[%s82 + $0x50] sm:$0xff]
    %v94 = vld [vmem:[%s82 + $0x58] sm:$0xff]
    %v95 = vld [vmem:[%s82 + $0x60] sm:$0xff]
    %v96 = vld [vmem:[%s82 + $0x68] sm:$0xff]
    %v97 = vld [vmem:[%s82 + $0x70] sm:$0xff]
    %v98 = vld [vmem:[%s82 + $0x78] sm:$0xff]
    %v99 = vld [vmem:[%s82 + $0x80] sm:$0xff]
    %v100 = vld [vmem:[%s82 + $0x88] sm:$0xff]
    %v101 = vld [vmem:[%s82 + $0x90] sm:$0xff]
    %v102 = vld [vmem:[%s82 + $0x98] sm:$0xff]
    %v103 = vld [vmem:[%s82 + $0xa0] sm:$0xff]
    %v104 = vld [vmem:[%s82 + $0xa8] sm:$0xff]
    %v105 = vld [vmem:[%s82 + $0xb0] sm:$0xff]
    %v106 = vld [vmem:[%s82 + $0xb8] sm:$0xff]
    %v107 = vld [vmem:[%s82 + $0xc0] sm:$0xff]
    %v108 = vld [vmem:[%s82 + $0xc8] sm:$0xff]
    %v109 = vld [vmem:[%s82 + $0xd0] sm:$0xff]
    %v110 = vld [vmem:[%s82 + $0xd8] sm:$0xff]
    %v111 = vld [vmem:[%s82 + $0xe0] sm:$0xff]
    %v112 = vld [vmem:[%s82 + $0xe8] sm:$0xff]
    %v113 = vld [vmem:[%s82 + $0xf0] sm:$0xff]
    %v114 = vld [vmem:[%s82 + $0xf8] sm:$0xff]
    %v115 = vld [vmem:[#allocation5] sm:$0xff]
    %v116 = vld [vmem:[#allocation5 + $0x8] sm:$0xff]
    %v117 = vld [vmem:[#allocation5 + $0x10] sm:$0xff]
    %v118 = vld [vmem:[#allocation5 + $0x18] sm:$0xff]
    %v119 = vld [vmem:[#allocation5 + $0x20] sm:$0xff]
    %v120 = vld [vmem:[#allocation5 + $0x28] sm:$0xff]
    %v121 = vld [vmem:[#allocation5 + $0x30] sm:$0xff]
    %v122 = vld [vmem:[#allocation5 + $0x38] sm:$0xff]
    %v123 = vld [vmem:[#allocation5 + $0x40] sm:$0xff]
    %v124 = vld [vmem:[#allocation5 + $0x48] sm:$0xff]
    %v125 = vld [vmem:[#allocation5 + $0x50] sm:$0xff]
    %v126 = vld [vmem:[#allocation5 + $0x58] sm:$0xff]
    %v127 = vld [vmem:[#allocation5 + $0x60] sm:$0xff]
    %v128 = vld [vmem:[#allocation5 + $0x68] sm:$0xff]
    %v129 = vld [vmem:[#allocation5 + $0x70] sm:$0xff]
    %v130 = vld [vmem:[#allocation5 + $0x78] sm:$0xff]
    %131 = vmatpush.xpose.msra.mxu0 %v75
    %132 = vmatpush.xpose.msra.mxu0 %v73
    %133 = vmatpush.xpose.msra.mxu0 %v71
    %134 = vmatpush.xpose.msra.mxu0 %v69
    %135 = vmatpush.xpose.msra.mxu0 %v67
    %136 = vmatpush.xpose.msra.mxu0 %v65
    %137 = vmatpush.xpose.msra.mxu0 %v63
    %138 = vmatpush.xpose.msra.mxu0 %v61
    %139 = vmatpush.xpose.msra.mxu0 %v59
    %140 = vmatpush.xpose.msra.mxu0 %v57
    %141 = vmatpush.xpose.msra.mxu0 %v55
    %142 = vmatpush.xpose.msra.mxu0 %v53
    %143 = vmatpush.xpose.msra.mxu0 %v51
    %144 = vmatpush.xpose.msra.mxu0 %v49
    %145 = vmatpush.xpose.msra.mxu0 %v47
    %146 = vmatpush.xpose.msra.mxu0 %v45
    %147 = vmatmul.f32.gmra.mxu0 %v83
    %v148 = vpop.f32.mrf.mxu0
    %v149 = vadd.f32 0.0, %v148
    %150 = vmatmul.f32.gmra.mxu0 %v85
    %v151 = vpop.f32.mrf.mxu0
    %v152 = vadd.f32 0.0, %v151
    %153 = vmatmul.f32.gmra.mxu0 %v87
    %v154 = vpop.f32.mrf.mxu0
    %v155 = vadd.f32 0.0, %v154
    %156 = vmatmul.f32.gmra.mxu0 %v89
    %v157 = vpop.f32.mrf.mxu0
    %v158 = vadd.f32 0.0, %v157
    %159 = vmatmul.f32.gmra.mxu0 %v91
    %v160 = vpop.f32.mrf.mxu0
    %v161 = vadd.f32 0.0, %v160
    %162 = vmatmul.f32.gmra.mxu0 %v93
    %v163 = vpop.f32.mrf.mxu0
    %v164 = vadd.f32 0.0, %v163
    %165 = vmatmul.f32.gmra.mxu0 %v95
    %v166 = vpop.f32.mrf.mxu0
    %v167 = vadd.f32 0.0, %v166
    %168 = vmatmul.f32.gmra.mxu0 %v97
    %v169 = vpop.f32.mrf.mxu0
    %v170 = vadd.f32 0.0, %v169
    %171 = vmatmul.f32.gmra.mxu0 %v99
    %v172 = vpop.f32.mrf.mxu0
    %v173 = vadd.f32 0.0, %v172
    %174 = vmatmul.f32.gmra.mxu0 %v101
    %v175 = vpop.f32.mrf.mxu0
    %v176 = vadd.f32 0.0, %v175
    %177 = vmatmul.f32.gmra.mxu0 %v103
    %v178 = vpop.f32.mrf.mxu0
    %v179 = vadd.f32 0.0, %v178
    %180 = vmatmul.f32.gmra.mxu0 %v105
    %v181 = vpop.f32.mrf.mxu0
    %v182 = vadd.f32 0.0, %v181
    %183 = vmatmul.f32.gmra.mxu0 %v107
    %v184 = vpop.f32.mrf.mxu0
    %v185 = vadd.f32 0.0, %v184
    %186 = vmatmul.f32.gmra.mxu0 %v109
    %v187 = vpop.f32.mrf.mxu0
    %v188 = vadd.f32 0.0, %v187
    %189 = vmatmul.f32.gmra.mxu0 %v111
    %v190 = vpop.f32.mrf.mxu0
    %v191 = vadd.f32 0.0, %v190
    %192 = vmatmul.f32.gmra.mxu0 %v113
    %v193 = vpop.f32.mrf.mxu0
    %v194 = vadd.f32 0.0, %v193
    %195 = vdwg.mxu0
    %196 = vmatpush.xpose.msra.mxu0 %v76
    %197 = vmatpush.xpose.msra.mxu0 %v74
    %198 = vmatpush.xpose.msra.mxu0 %v72
    %199 = vmatpush.xpose.msra.mxu0 %v70
    %200 = vmatpush.xpose.msra.mxu0 %v68
    %201 = vmatpush.xpose.msra.mxu0 %v66
    %202 = vmatpush.xpose.msra.mxu0 %v64
    %203 = vmatpush.xpose.msra.mxu0 %v62
    %204 = vmatpush.xpose.msra.mxu0 %v60
    %205 = vmatpush.xpose.msra.mxu0 %v58
    %206 = vmatpush.xpose.msra.mxu0 %v56
    %207 = vmatpush.xpose.msra.mxu0 %v54
    %208 = vmatpush.xpose.msra.mxu0 %v52
    %209 = vmatpush.xpose.msra.mxu0 %v50
    %210 = vmatpush.xpose.msra.mxu0 %v48
    %211 = vmatpush.xpose.msra.mxu0 %v46
    %212 = vmatmul.f32.gmra.mxu0 %v84
    %v213 = vpop.f32.mrf.mxu0
    %v214 = vadd.f32 %v149, %v213
    %215 = vmatmul.f32.gmra.mxu0 %v86
    %v216 = vpop.f32.mrf.mxu0
    %v217 = vadd.f32 %v152, %v216
    %218 = vmatmul.f32.gmra.mxu0 %v88
    %v219 = vpop.f32.mrf.mxu0
    %v220 = vadd.f32 %v155, %v219
    %221 = vmatmul.f32.gmra.mxu0 %v90
    %v222 = vpop.f32.mrf.mxu0
    %v223 = vadd.f32 %v158, %v222
    %224 = vmatmul.f32.gmra.mxu0 %v92
    %v225 = vpop.f32.mrf.mxu0
    %v226 = vadd.f32 %v161, %v225
    %227 = vmatmul.f32.gmra.mxu0 %v94
    %v228 = vpop.f32.mrf.mxu0
    %v229 = vadd.f32 %v164, %v228
    %230 = vmatmul.f32.gmra.mxu0 %v96
    %v231 = vpop.f32.mrf.mxu0
    %v232 = vadd.f32 %v167, %v231
    %233 = vmatmul.f32.gmra.mxu0 %v98
    %v234 = vpop.f32.mrf.mxu0
    %v235 = vadd.f32 %v170, %v234
    %236 = vmatmul.f32.gmra.mxu0 %v100
    %v237 = vpop.f32.mrf.mxu0
    %v238 = vadd.f32 %v173, %v237
    %239 = vmatmul.f32.gmra.mxu0 %v102
    %v240 = vpop.f32.mrf.mxu0
    %v241 = vadd.f32 %v176, %v240
    %242 = vmatmul.f32.gmra.mxu0 %v104
    %v243 = vpop.f32.mrf.mxu0
    %v244 = vadd.f32 %v179, %v243
    %245 = vmatmul.f32.gmra.mxu0 %v106
    %v246 = vpop.f32.mrf.mxu0
    %v247 = vadd.f32 %v182, %v246
    %248 = vmatmul.f32.gmra.mxu0 %v108
    %v249 = vpop.f32.mrf.mxu0
    %v250 = vadd.f32 %v185, %v249
    %251 = vmatmul.f32.gmra.mxu0 %v110
    %v252 = vpop.f32.mrf.mxu0
    %v253 = vadd.f32 %v188, %v252
    %254 = vmatmul.f32.gmra.mxu0 %v112
    %v255 = vpop.f32.mrf.mxu0
    %v256 = vadd.f32 %v191, %v255
    %257 = vmatmul.f32.gmra.mxu0 %v114
    %v258 = vpop.f32.mrf.mxu0
    %v259 = vadd.f32 %v194, %v258
    %260 = vdwg.mxu0
    %v261 = vadd.f32 %v115, %v214
    %v262 = vadd.f32 %v116, %v217
    %v263 = vadd.f32 %v117, %v220
    %v264 = vadd.f32 %v118, %v223
    %v265 = vadd.f32 %v119, %v226
    %v266 = vadd.f32 %v120, %v229
    %v267 = vadd.f32 %v121, %v232
    %v268 = vadd.f32 %v122, %v235
    %v269 = vadd.f32 %v123, %v238
    %v270 = vadd.f32 %v124, %v241
    %v271 = vadd.f32 %v125, %v244
    %v272 = vadd.f32 %v126, %v247
    %v273 = vadd.f32 %v127, %v250
    %v274 = vadd.f32 %v128, %v253
    %v275 = vadd.f32 %v129, %v256
    %v276 = vadd.f32 %v130, %v259
    %277 = vst [vmem:[#allocation5] sm:$0xff] %v261
    %278 = vst [vmem:[#allocation5 + $0x8] sm:$0xff] %v262
    %279 = vst [vmem:[#allocation5 + $0x10] sm:$0xff] %v263
    %280 = vst [vmem:[#allocation5 + $0x18] sm:$0xff] %v264
    %281 = vst [vmem:[#allocation5 + $0x20] sm:$0xff] %v265
    %282 = vst [vmem:[#allocation5 + $0x28] sm:$0xff] %v266
    %283 = vst [vmem:[#allocation5 + $0x30] sm:$0xff] %v267
    %284 = vst [vmem:[#allocation5 + $0x38] sm:$0xff] %v268
    %285 = vst [vmem:[#allocation5 + $0x40] sm:$0xff] %v269
    %286 = vst [vmem:[#allocation5 + $0x48] sm:$0xff] %v270
    %287 = vst [vmem:[#allocation5 + $0x50] sm:$0xff] %v271
    %288 = vst [vmem:[#allocation5 + $0x58] sm:$0xff] %v272
    %289 = vst [vmem:[#allocation5 + $0x60] sm:$0xff] %v273
    %290 = vst [vmem:[#allocation5 + $0x68] sm:$0xff] %v274
    %291 = vst [vmem:[#allocation5 + $0x70] sm:$0xff] %v275
    %292 = vst [vmem:[#allocation5 + $0x78] sm:$0xff] %v276
    // Predicated region
    $region14: #{tpu_custom_call.1} parent=1 // pred_check
      %p293 = pneg %p25
    $region15: #{tpu_custom_call.1} parent=1 // pred_check_branch
      %295 = sbr.rel (%p293) target = $region17
    $region16: #{tpu_custom_call.1} parent=1 // pred_region
      %v296 = vld [vmem:[#allocation5] sm:$0xff]
      %v297 = vld [vmem:[#allocation5 + $0x8] sm:$0xff]
      %v298 = vld [vmem:[#allocation5 + $0x10] sm:$0xff]
      %v299 = vld [vmem:[#allocation5 + $0x18] sm:$0xff]
      %v300 = vld [vmem:[#allocation5 + $0x20] sm:$0xff]
      %v301 = vld [vmem:[#allocation5 + $0x28] sm:$0xff]
      %v302 = vld [vmem:[#allocation5 + $0x30] sm:$0xff]
      %v303 = vld [vmem:[#allocation5 + $0x38] sm:$0xff]
      %v304 = vld [vmem:[#allocation5 + $0x40] sm:$0xff]
      %v305 = vld [vmem:[#allocation5 + $0x48] sm:$0xff]
      %v306 = vld [vmem:[#allocation5 + $0x50] sm:$0xff]
      %v307 = vld [vmem:[#allocation5 + $0x58] sm:$0xff]
      %v308 = vld [vmem:[#allocation5 + $0x60] sm:$0xff]
      %v309 = vld [vmem:[#allocation5 + $0x68] sm:$0xff]
      %v310 = vld [vmem:[#allocation5 + $0x70] sm:$0xff]
      %v311 = vld [vmem:[#allocation5 + $0x78] sm:$0xff]
      %v312 = vmul.f32 %v296, 0.00048828125
      %v313 = vmul.f32 %v297, 0.00048828125
      %v314 = vmul.f32 %v298, 0.00048828125
      %v315 = vmul.f32 %v299, 0.00048828125
      %v316 = vmul.f32 %v300, 0.00048828125
      %v317 = vmul.f32 %v301, 0.00048828125
      %v318 = vmul.f32 %v302, 0.00048828125
      %v319 = vmul.f32 %v303, 0.00048828125
      %v320 = vmul.f32 %v304, 0.00048828125
      %v321 = vmul.f32 %v305, 0.00048828125
      %v322 = vmul.f32 %v306, 0.00048828125
      %v323 = vmul.f32 %v307, 0.00048828125
      %v324 = vmul.f32 %v308, 0.00048828125
      %v325 = vmul.f32 %v309, 0.00048828125
      %v326 = vmul.f32 %v310, 0.00048828125
      %v327 = vmul.f32 %v311, 0.00048828125
      %328 = vst [vmem:[#allocation5] sm:$0xff] %v312
      %329 = vst [vmem:[#allocation5 + $0x8] sm:$0xff] %v313
      %330 = vst [vmem:[#allocation5 + $0x10] sm:$0xff] %v314
      %331 = vst [vmem:[#allocation5 + $0x18] sm:$0xff] %v315
      %332 = vst [vmem:[#allocation5 + $0x20] sm:$0xff] %v316
      %333 = vst [vmem:[#allocation5 + $0x28] sm:$0xff] %v317
      %334 = vst [vmem:[#allocation5 + $0x30] sm:$0xff] %v318
      %335 = vst [vmem:[#allocation5 + $0x38] sm:$0xff] %v319
      %336 = vst [vmem:[#allocation5 + $0x40] sm:$0xff] %v320
      %337 = vst [vmem:[#allocation5 + $0x48] sm:$0xff] %v321
      %338 = vst [vmem:[#allocation5 + $0x50] sm:$0xff] %v322
      %339 = vst [vmem:[#allocation5 + $0x58] sm:$0xff] %v323
      %340 = vst [vmem:[#allocation5 + $0x60] sm:$0xff] %v324
      %341 = vst [vmem:[#allocation5 + $0x68] sm:$0xff] %v325
      %342 = vst [vmem:[#allocation5 + $0x70] sm:$0xff] %v326
      %343 = vst [vmem:[#allocation5 + $0x78] sm:$0xff] %v327
    $region17: #{tpu_custom_call.1} parent=1 // pred_fallthru
      _
    // Predicated region
    $region18: #{tpu_custom_call.1} parent=1 // pred_check
      _
    $region19: #{tpu_custom_call.1} parent=1 // pred_check_branch
      %345 = sbr.rel (0) target = $region21
    $region20: #{tpu_custom_call.1} parent=1 // pred_region
      %347 = vsyncadd [#allocation4], 0
      %s348 = sshll.u32 [#allocation5], 4
      %s349 = int_to_ptr.vmem [resolvable:$true] %s348
      %s350 = sshll.u32 %s1, 4
      %s351 = int_to_ptr.hbm [resolvable:$true] %s350
      %356 = dma.vmem_to_hbm [thread:$0]  %s349, 2048, %s351, [#allocation4], 128, 128, 8
    $region21: #{tpu_custom_call.1} parent=1 // pred_fallthru
      _
    // Predicated region
    $region22: #{tpu_custom_call.1} parent=1 // pred_check
      _
    $region23: #{tpu_custom_call.1} parent=1 // pred_check_branch
      %358 = sbr.rel (0) target = $region25
    $region24: #{tpu_custom_call.1} parent=1 // pred_region
      %360 = dma.done [#allocation4], 2048
    $region25: #{tpu_custom_call.1} parent=1 // pred_fallthru
      _
    %361 = vsyncpa [#allocation3], 1
    %362 = vsyncpa [#allocation4], 1

</llo_original>
